<compile_context>
chip_gen: v5e
topology: v5e:2x2
jax: 0.10.0
libtpu: 0.0.40
codegen_flags: <defaults>
</compile_context>

<pallas_src>
import math
import jax
import jax.numpy as jnp
from jax.experimental import pallas as pl
from jax.experimental.pallas import tpu as pltpu


def _round_up(x, m):
    return (x + m - 1) // m * m


def _vmem_capacity_bytes():
    """Per-core VMEM capacity; conservative 64 MiB (v7x) fallback."""
    try:
        return int(pltpu.get_tpu_info().vmem_capacity_bytes)
    except Exception:
        return 64 * 1024 * 1024


# -----------------------------------------------------------------------------
# Kernels
# -----------------------------------------------------------------------------
def mlp_resident_kernel(x_ref, w1t_ref, b1_ref, w2t_ref, b2_ref, o_ref):
    # x_ref: (tm, d_in)  w1t_ref: (d_in, d_hidden_p)  b1_ref: (1, d_hidden_p)
    # w2t_ref: (d_hidden_p, d_out_p)  b2_ref: (1, d_out_p)  o_ref: (tm, d_out_p)
    # Weights have constant block indices across the row grid -> resident in
    # VMEM, DMA'd from HBM only once per pallas_call.
    h = jnp.dot(x_ref[...], w1t_ref[...], preferred_element_type=jnp.float32)
    h = jnp.maximum(h + b1_ref[...].astype(jnp.float32), 0.0)
    y = jnp.dot(h.astype(w2t_ref.dtype), w2t_ref[...],
                preferred_element_type=jnp.float32)
    o_ref[...] = (y + b2_ref[...].astype(jnp.float32)).astype(o_ref.dtype)


def mlp_tiled_kernel(x_ref, w1t_ref, b1_ref, w2t_ref, b2_ref, o_ref, acc_ref):
    # x_ref: (tm, d_in)   w1t_ref: (d_in, tk)     b1_ref: (1, tk)
    # w2t_ref: (tk, d_out_p)  b2_ref: (1, d_out_p)
    # o_ref: (tm, d_out_p)    acc_ref: (tm, d_out_p) f32 scratch
    k = pl.program_id(1)

    @pl.when(k == 0)
    def _init():
        acc_ref[...] = jnp.zeros_like(acc_ref)

    # d_in is not tiled -> this is the complete pre-activation for this hidden
    # tile, so the ReLU here is exact.
    h = jnp.dot(x_ref[...], w1t_ref[...], preferred_element_type=jnp.float32)
    h = jnp.maximum(h + b1_ref[...].astype(jnp.float32), 0.0)
    acc_ref[...] += jnp.dot(h.astype(w2t_ref.dtype), w2t_ref[...],
                            preferred_element_type=jnp.float32)

    @pl.when(k == pl.num_programs(1) - 1)
    def _finalize():
        o_ref[...] = (acc_ref[...] + b2_ref[...].astype(jnp.float32)
                      ).astype(o_ref.dtype)


# -----------------------------------------------------------------------------
# Parameter prep (one-time; padding hoisted out of the forward hot path)
# -----------------------------------------------------------------------------
def prepare_mlp_params(w1t, b1, w2t, b2):
    """Pad weights/biases once so mlp_forward never pads params per call.

    w1t: (d_in, d_hidden)   b1: (d_hidden,)
    w2t: (d_hidden, d_out)  b2: (d_out,)
    """
    d_in, d_hidden = w1t.shape
    d_hidden2, d_out = w2t.shape
    assert d_hidden == d_hidden2
    d_hidden_p = _round_up(d_hidden, 128)
    d_out_p = _round_up(d_out, 128)

    w1tp = w1t if d_hidden_p == d_hidden else jnp.pad(
        w1t, ((0, 0), (0, d_hidden_p - d_hidden)))
    b1p = b1.reshape(1, d_hidden)
    if d_hidden_p != d_hidden:
        b1p = jnp.pad(b1p, ((0, 0), (0, d_hidden_p - d_hidden)))
    w2tp = w2t
    if d_hidden_p != d_hidden or d_out_p != d_out:
        w2tp = jnp.pad(w2t, ((0, d_hidden_p - d_hidden), (0, d_out_p - d_out)))
    b2p = b2.reshape(1, d_out)
    if d_out_p != d_out:
        b2p = jnp.pad(b2p, ((0, 0), (0, d_out_p - d_out)))

    return {"w1t": w1tp, "b1": b1p, "w2t": w2tp, "b2": b2p,
            "d_in": d_in, "d_out": d_out}


# -----------------------------------------------------------------------------
# Forward
# -----------------------------------------------------------------------------
def mlp_forward(x, params, *, tm=None, mode="auto"):
    """MLP forward. `params` comes from prepare_mlp_params().

    mode: "auto" (resident weights when they fit VMEM), "resident", or "tiled".
    """
    w1t, b1, w2t, b2 = params["w1t"], params["b1"], params["w2t"], params["b2"]
    d_out = params["d_out"]

    orig_shape = x.shape
    d_in = orig_shape[-1]
    x2 = x.reshape(-1, d_in)
    B = x2.shape[0]
    d_in_w, d_hidden_p = w1t.shape
    _, d_out_p = w2t.shape
    assert d_in == d_in_w == params["d_in"]

    x_item = jnp.dtype(x.dtype).itemsize
    w_item = jnp.dtype(w1t.dtype).itemsize
    b_item = jnp.dtype(b1.dtype).itemsize
    sublane = {4: 8, 2: 16, 1: 32}.get(x_item, 8)

    # Row tile: 256 fills the v6e/v7x MXU when the batch is big enough.
    if tm is None:
        tm = 256 if B >= 256 else 128
    tm = max(sublane, min(_round_up(tm, sublane), _round_up(B, sublane)))

    capacity = _vmem_capacity_bytes()
    budget = int(0.8 * capacity)            # ~51 MiB v7x, ~102 MiB v5e/v6e

    def resident_bytes(tm_):
        # weights/biases counted double-buffered (conservative), f32 headroom
        # for the (tm, d_hidden_p) intermediate, plus a fixed margin.
        return (2 * (d_in * d_hidden_p + d_hidden_p * d_out_p) * w_item
                + 2 * (d_hidden_p + d_out_p) * b_item
                + 2 * tm_ * d_in * x_item
                + 2 * tm_ * d_out_p * x_item
                + 2 * tm_ * d_hidden_p * 4
                + (2 << 20))

    def tiled_bytes(tm_, tk_):
        return (2 * (d_in * tk_ + tk_ * d_out_p) * w_item
                + 2 * (tk_ + d_out_p) * b_item
                + 2 * tm_ * d_in * x_item
                + 2 * tm_ * d_out_p * x_item
                + tm_ * d_out_p * 4                 # f32 accumulator scratch
                + tm_ * tk_ * 4                     # f32 h temporary
                + (2 << 20))

    use_resident = False
    est_bytes = None
    if mode in ("auto", "resident"):
        for tm_try in sorted({tm, min(tm, 128)}, reverse=True):
            rb = resident_bytes(tm_try)
            if rb <= budget:
                tm, use_resident, est_bytes = tm_try, True, rb
                break
        if mode == "resident" and not use_resident:
            raise ValueError("resident mode requested but weights don't fit VMEM")

    tk = None
    if not use_resident:
        cands = [t for t in (1024, 512, 256, 128)
                 if t <= d_hidden_p and d_hidden_p % t == 0]
        for tm_try in sorted({tm, min(tm, 128)}, reverse=True):
            for t in cands:
                if tiled_bytes(tm_try, t) <= budget:
                    tm, tk = tm_try, t
                    break
            if tk is not None:
                break
        if tk is None:                       # last resort: smallest tiles
            tm, tk = max(sublane, min(tm, 128)), 128
        est_bytes = tiled_bytes(tm, tk)

    B_p = _round_up(B, tm)
    xp = x2 if B_p == B else jnp.pad(x2, ((0, B_p - B), (0, 0)))

    # vmem limit: at least the budget (generation-aware), with 8 MiB of
    # headroom below physical capacity for compiler-internal scratch.
    vmem_limit = int(min(max(budget, int(1.25 * est_bytes)),
                         capacity - (8 << 20)))

    flops = 2 * B_p * d_hidden_p * (d_in + d_out_p)
    bytes_accessed = int(xp.size * x_item
                         + (w1t.size + w2t.size) * w_item
                         + (b1.size + b2.size) * b_item
                         + B_p * d_out_p * x_item)
    cost = pl.CostEstimate(flops=int(flops), transcendentals=0,
                           bytes_accessed=bytes_accessed)

    if use_resident:
        out_p = pl.pallas_call(
            mlp_resident_kernel,
            out_shape=jax.ShapeDtypeStruct((B_p, d_out_p), x.dtype),
            grid_spec=pltpu.PrefetchScalarGridSpec(
                num_scalar_prefetch=0,
                grid=(B_p // tm,),
                in_specs=[
                    pl.BlockSpec((tm, d_in), lambda i: (i, 0)),
                    pl.BlockSpec((d_in, d_hidden_p), lambda i: (0, 0)),
                    pl.BlockSpec((1, d_hidden_p), lambda i: (0, 0)),
                    pl.BlockSpec((d_hidden_p, d_out_p), lambda i: (0, 0)),
                    pl.BlockSpec((1, d_out_p), lambda i: (0, 0)),
                ],
                out_specs=pl.BlockSpec((tm, d_out_p), lambda i: (i, 0)),
            ),
            compiler_params=pltpu.CompilerParams(
                dimension_semantics=("parallel",),
                vmem_limit_bytes=vmem_limit,
            ),
            cost_estimate=cost,
        )(xp, w1t, b1, w2t, b2)
    else:
        out_p = pl.pallas_call(
            mlp_tiled_kernel,
            out_shape=jax.ShapeDtypeStruct((B_p, d_out_p), x.dtype),
            grid_spec=pltpu.PrefetchScalarGridSpec(
                num_scalar_prefetch=0,
                grid=(B_p // tm, d_hidden_p // tk),
                in_specs=[
                    pl.BlockSpec((tm, d_in), lambda i, k: (i, 0)),
                    pl.BlockSpec((d_in, tk), lambda i, k: (0, k)),
                    pl.BlockSpec((1, tk), lambda i, k: (0, k)),
                    pl.BlockSpec((tk, d_out_p), lambda i, k: (k, 0)),
                    pl.BlockSpec((1, d_out_p), lambda i, k: (0, 0)),
                ],
                out_specs=pl.BlockSpec((tm, d_out_p), lambda i, k: (i, 0)),
                scratch_shapes=[pltpu.VMEM((tm, d_out_p), jnp.float32)],
            ),
            compiler_params=pltpu.CompilerParams(
                dimension_semantics=("parallel", "arbitrary"),
                vmem_limit_bytes=vmem_limit,
            ),
            cost_estimate=cost,
        )(xp, w1t, b1, w2t, b2)

    out = out_p[:B, :d_out]
    return out.reshape(orig_shape[:-1] + (d_out,))


# -----------------------------------------------------------------------------
# Init / reference (mirrors the torch module), stored pre-transposed
# -----------------------------------------------------------------------------
def init_mlp_params(key, d_in, d_hidden, d_out, dtype=jnp.float32):
    k1, k2, k3, k4 = jax.random.split(key, 4)
    # fc1.weight: kaiming_uniform_(nonlinearity='relu'), fan_in = d_in
    bound1 = math.sqrt(2.0) * math.sqrt(3.0 / d_in)
    w1t = jax.random.uniform(k1, (d_in, d_hidden), dtype, -bound1, bound1)
    # fc2.weight: xavier_uniform_
    bound2 = math.sqrt(6.0 / (d_hidden + d_out))
    w2t = jax.random.uniform(k2, (d_hidden, d_out), dtype, -bound2, bound2)
    # biases: nn.Linear default uniform(-1/sqrt(fan_in), 1/sqrt(fan_in))
    bb1 = 1.0 / math.sqrt(d_in)
    b1 = jax.random.uniform(k3, (d_hidden,), dtype, -bb1, bb1)
    bb2 = 1.0 / math.sqrt(d_hidden)
    b2 = jax.random.uniform(k4, (d_out,), dtype, -bb2, bb2)
    return w1t, b1, w2t, b2


def mlp_reference(x, w1t, b1, w2t, b2):
    f32 = jnp.float32
    h = jnp.dot(x.astype(f32), w1t.astype(f32), precision="highest")
    h = jnp.maximum(h + b1.astype(f32), 0.0)
    return jnp.dot(h, w2t.astype(f32), precision="highest") + b2.astype(f32)


if __name__ == "__main__":
    key = jax.random.PRNGKey(0)

    # Case 1: small shapes, resident-weight fast path (weights DMA'd once).
    kx, kp, key = jax.random.split(key, 3)
    B, d_in, d_hidden, d_out = 16, 32, 64, 32
    x = jax.random.normal(kx, (B, d_in), jnp.float32)
    raw = init_mlp_params(kp, d_in, d_hidden, d_out)
    params = prepare_mlp_params(*raw)
    out = jax.block_until_ready(mlp_forward(x, params))
    ref = mlp_reference(x, *raw)
    assert out.shape == (B, d_out)
    assert jnp.allclose(out, ref, atol=2e-3, rtol=2e-3), "mismatch (resident)"

    # Case 2: forced tiled fallback — exercises batch padding, hidden-tile
    # accumulation with pl.when init/finalize, and d_out padding.
    kx2, kp2, key = jax.random.split(key, 3)
    B2, d_in2, d_hidden2, d_out2 = 272, 96, 384, 72
    x2 = jax.random.normal(kx2, (B2, d_in2), jnp.float32)
    raw2 = init_mlp_params(kp2, d_in2, d_hidden2, d_out2)
    params2 = prepare_mlp_params(*raw2)
    out2 = jax.block_until_ready(mlp_forward(x2, params2, mode="tiled"))
    ref2 = mlp_reference(x2, *raw2)
    assert out2.shape == (B2, d_out2)
    assert jnp.allclose(out2, ref2, atol=5e-3, rtol=5e-3), "mismatch (tiled)"

    # Case 3: bf16 params/activations (narrow-dtype weight streaming), f32 acc.
    kx3, kp3, key = jax.random.split(key, 3)
    B3, d_in3, d_hidden3, d_out3 = 8, 32, 64, 16
    x3 = jax.random.normal(kx3, (B3, d_in3), jnp.bfloat16)
    raw3 = init_mlp_params(kp3, d_in3, d_hidden3, d_out3, dtype=jnp.bfloat16)
    params3 = prepare_mlp_params(*raw3)
    out3 = jax.block_until_ready(mlp_forward(x3, params3))
    ref3 = mlp_reference(x3, *raw3)
    assert out3.shape == (B3, d_out3)
    assert jnp.allclose(out3.astype(jnp.float32), ref3, atol=0.2, rtol=0.2), \
        "mismatch (bf16)"

    print("KERNEL_OK")
</pallas_src>

<mosaic_0001>
module attributes {stable_mosaic.version = 11 : i64} {
  func.func @mlp_resident_kernel(%arg0: i32, %arg1: memref<16x32xf32, #tpu.memory_space<vmem>>, %arg2: memref<32x128xf32, #tpu.memory_space<vmem>>, %arg3: memref<1x128xf32, #tpu.memory_space<vmem>>, %arg4: memref<128x128xf32, #tpu.memory_space<vmem>>, %arg5: memref<1x128xf32, #tpu.memory_space<vmem>>, %arg6: memref<16x128xf32, #tpu.memory_space<vmem>>) attributes {dimension_semantics = [#tpu.dimension_semantics<parallel>], iteration_bounds = array<i64: 1>, scalar_prefetch = 0 : i64, scratch_operands = 0 : i64, tpu.core_type = #tpu.core_type<tc>, window_params = [{transform_indices = @transform_0, window_bounds = array<i64: 16, 32>}, {pipeline_mode = #tpu.pipeline_mode<synchronous>, transform_indices = @transform_1, window_bounds = array<i64: 32, 128>}, {pipeline_mode = #tpu.pipeline_mode<synchronous>, transform_indices = @transform_2, window_bounds = array<i64: 1, 128>}, {pipeline_mode = #tpu.pipeline_mode<synchronous>, transform_indices = @transform_3, window_bounds = array<i64: 128, 128>}, {pipeline_mode = #tpu.pipeline_mode<synchronous>, transform_indices = @transform_4, window_bounds = array<i64: 1, 128>}, {transform_indices = @transform_5, window_bounds = array<i64: 16, 128>}]} {
    %c0 = arith.constant 0 : index
    %c0_0 = arith.constant 0 : index
    %0 = vector.load %arg1[%c0, %c0_0] : memref<16x32xf32, #tpu.memory_space<vmem>>, vector<16x32xf32>
    %c0_1 = arith.constant 0 : index
    %c0_2 = arith.constant 0 : index
    %1 = vector.load %arg2[%c0_1, %c0_2] : memref<32x128xf32, #tpu.memory_space<vmem>>, vector<32x128xf32>
    %cst = arith.constant dense<0.000000e+00> : vector<16x128xf32>
    %2 = tpu.matmul %0, %1, %cst {dimension_numbers = #tpu.dot_dimension_numbers<[1], [0], [0], [1], [0, 0, 1, 1], [], []>} : vector<16x32xf32>, vector<32x128xf32>, vector<16x128xf32> -> vector<16x128xf32>
    %c0_3 = arith.constant 0 : index
    %c0_4 = arith.constant 0 : index
    %3 = vector.load %arg3[%c0_3, %c0_4] : memref<1x128xf32, #tpu.memory_space<vmem>>, vector<1x128xf32>
    %4 = vector.broadcast %3 : vector<1x128xf32> to vector<16x128xf32>
    %5 = arith.addf %2, %4 : vector<16x128xf32>
    %cst_5 = arith.constant 0.000000e+00 : f32
    %6 = vector.broadcast %cst_5 : f32 to vector<16x128xf32>
    %7 = arith.maximumf %5, %6 : vector<16x128xf32>
    %c0_6 = arith.constant 0 : index
    %c0_7 = arith.constant 0 : index
    %8 = vector.load %arg4[%c0_6, %c0_7] : memref<128x128xf32, #tpu.memory_space<vmem>>, vector<128x128xf32>
    %cst_8 = arith.constant dense<0.000000e+00> : vector<16x128xf32>
    %9 = tpu.matmul %7, %8, %cst_8 {dimension_numbers = #tpu.dot_dimension_numbers<[1], [0], [0], [1], [0, 0, 1, 1], [], []>} : vector<16x128xf32>, vector<128x128xf32>, vector<16x128xf32> -> vector<16x128xf32>
    %c0_9 = arith.constant 0 : index
    %c0_10 = arith.constant 0 : index
    %10 = vector.load %arg5[%c0_9, %c0_10] : memref<1x128xf32, #tpu.memory_space<vmem>>, vector<1x128xf32>
    %11 = vector.broadcast %10 : vector<1x128xf32> to vector<16x128xf32>
    %12 = arith.addf %9, %11 : vector<16x128xf32>
    %c0_11 = arith.constant 0 : index
    %c0_12 = arith.constant 0 : index
    %13 = vector.load %arg6[%c0_11, %c0_12] : memref<16x128xf32, #tpu.memory_space<vmem>>, vector<16x128xf32>
    tpu.vector_store %arg6[%c0_11, %c0_12], %12 {strides = array<i32>} : memref<16x128xf32, #tpu.memory_space<vmem>>, vector<16x128xf32>,
    return
  }
  func.func @transform_0(%arg0: i32) -> (i32, i32) {
    %c0_i32 = arith.constant 0 : i32
    %c0_i32_0 = arith.constant 0 : i32
    return %arg0, %c0_i32 : i32, i32
  }
  func.func @transform_1(%arg0: i32) -> (i32, i32) {
    %c0_i32 = arith.constant 0 : i32
    %c0_i32_0 = arith.constant 0 : i32
    %c0_i32_1 = arith.constant 0 : i32
    return %c0_i32, %c0_i32_0 : i32, i32
  }
  func.func @transform_2(%arg0: i32) -> (i32, i32) {
    %c0_i32 = arith.constant 0 : i32
    %c0_i32_0 = arith.constant 0 : i32
    %c0_i32_1 = arith.constant 0 : i32
    return %c0_i32, %c0_i32_0 : i32, i32
  }
  func.func @transform_3(%arg0: i32) -> (i32, i32) {
    %c0_i32 = arith.constant 0 : i32
    %c0_i32_0 = arith.constant 0 : i32
    %c0_i32_1 = arith.constant 0 : i32
    return %c0_i32, %c0_i32_0 : i32, i32
  }
  func.func @transform_4(%arg0: i32) -> (i32, i32) {
    %c0_i32 = arith.constant 0 : i32
    %c0_i32_0 = arith.constant 0 : i32
    %c0_i32_1 = arith.constant 0 : i32
    return %c0_i32, %c0_i32_0 : i32, i32
  }
  func.func @transform_5(%arg0: i32) -> (i32, i32) {
    %c0_i32 = arith.constant 0 : i32
    %c0_i32_0 = arith.constant 0 : i32
    return %arg0, %c0_i32 : i32, i32
  }
}

</mosaic_0001>

<llo_original>
// kernel: tpu_custom_call.1
$region0: #{tpu_custom_call.1}
  #allocation0 [shape = 'u32[]', space=smem, size = 0x4, offset = 0x4, fixed_abs, tag = 'smem constant byte address 0x4 - core index']
  #allocation1 [shape = 'u32[72,128]{1,0:T(1,128)}', space=vmem, size = 0x9000, scoped, tag = 'internal scratch']
  %s0 = inlined_call_operand.hbm [shape: f32[16,32], index: 0, kind: input, shape index: {}]
  %s1 = inlined_call_operand.hbm [shape: f32[32,128], index: 1, kind: input, shape index: {}]
  %s2 = inlined_call_operand.vmem [shape: f32[1,128], index: 2, kind: input, shape index: {}]
  %s3 = inlined_call_operand.hbm [shape: f32[128,128], index: 3, kind: input, shape index: {}]
  %s4 = inlined_call_operand.vmem [shape: f32[1,128], index: 4, kind: input, shape index: {}]
  %s5 = inlined_call_operand.hbm [shape: f32[16,128], index: 5, kind: output, shape index: {}]
  %s6 = sld [smem:[#allocation0]]
  $region42: #{tpu_custom_call.1} parent=0
    _
  %s8 = ssub.s32 1, %s6
  %s9 = scalar_select 0, %s8, %s6
  $region1: #{tpu_custom_call.1} parent=0
    #allocation2 [shape = 'u8[8192]{0}', space=vmem, size = 0x2000, scoped, tag = 'input window, operand 0, single buffered']
    #allocation3 [shape = 's32[1]{0}', space=sflag, size = 0x4, scoped, tag = 'scoped memory for tpu_custom_call.1']
    #allocation4 [shape = 's32[1]{0}', space=sflag, size = 0x4, scoped, tag = 'scoped memory for tpu_custom_call.1']
    #allocation5 [shape = 'u8[16384]{0}', space=vmem, size = 0x4000, scoped, tag = 'input window, operand 1, single buffered']
    #allocation6 [shape = 's32[1]{0}', space=sflag, size = 0x4, scoped, tag = 'scoped memory for tpu_custom_call.1']
    #allocation7 [shape = 'u8[65536]{0}', space=vmem, size = 0x10000, scoped, tag = 'input window, operand 3, single buffered']
    #allocation8 [shape = 'u8[8192]{0}', space=vmem, size = 0x2000, scoped, tag = 'output window, operand 0, single buffered']
    %10 = vsyncpa [#allocation3], 0
    %11 = vsyncpa [#allocation6], 0
    %12 = vsyncpa [#allocation4], 0
    // Predicated region
    $region2: #{tpu_custom_call.1} parent=1 // pred_check
      _
    $region3: #{tpu_custom_call.1} parent=1 // pred_check_branch
      %14 = sbr.rel (0) target = $region5
    $region4: #{tpu_custom_call.1} parent=1 // pred_region
      %16 = vsyncadd [#allocation3], 0
      %s17 = sshll.u32 %s0, 4
      %s18 = int_to_ptr.hbm [resolvable:$true] %s17
      %s19 = sshll.u32 [#allocation2], 4
      %s20 = int_to_ptr.vmem [resolvable:$true] %s19
      %25 = dma.hbm_to_vmem [thread:$0]  %s18, 256, %s20, [#allocation3], 128, 128, 8
    $region5: #{tpu_custom_call.1} parent=1 // pred_fallthru
      _
    // Predicated region
    $region6: #{tpu_custom_call.1} parent=1 // pred_check
      _
    $region7: #{tpu_custom_call.1} parent=1 // pred_check_branch
      %27 = sbr.rel (0) target = $region9
    $region8: #{tpu_custom_call.1} parent=1 // pred_region
      %29 = vsyncadd [#allocation6], 0
      %s30 = sshll.u32 %s1, 4
      %s31 = int_to_ptr.hbm [resolvable:$true] %s30
      %s32 = sshll.u32 [#allocation5], 4
      %s33 = int_to_ptr.vmem [resolvable:$true] %s32
      %38 = dma.hbm_to_vmem [thread:$0]  %s31, 512, %s33, [#allocation6], 128, 128, 8
    $region9: #{tpu_custom_call.1} parent=1 // pred_fallthru
      _
    // Predicated region
    $region10: #{tpu_custom_call.1} parent=1 // pred_check
      _
    $region11: #{tpu_custom_call.1} parent=1 // pred_check_branch
      %40 = sbr.rel (0) target = $region13
    $region12: #{tpu_custom_call.1} parent=1 // pred_region
      _
    $region13: #{tpu_custom_call.1} parent=1 // pred_fallthru
      _
    // Predicated region
    $region14: #{tpu_custom_call.1} parent=1 // pred_check
      _
    $region15: #{tpu_custom_call.1} parent=1 // pred_check_branch
      %42 = sbr.rel (0) target = $region17
    $region16: #{tpu_custom_call.1} parent=1 // pred_region
      %44 = vsyncadd [#allocation6], 0
      %s45 = sshll.u32 %s3, 4
      %s46 = int_to_ptr.hbm [resolvable:$true] %s45
      %s47 = sshll.u32 [#allocation7], 4
      %s48 = int_to_ptr.vmem [resolvable:$true] %s47
      %53 = dma.hbm_to_vmem [thread:$0]  %s46, 2048, %s48, [#allocation6], 128, 128, 8
    $region17: #{tpu_custom_call.1} parent=1 // pred_fallthru
      _
    // Predicated region
    $region18: #{tpu_custom_call.1} parent=1 // pred_check
      _
    $region19: #{tpu_custom_call.1} parent=1 // pred_check_branch
      %55 = sbr.rel (0) target = $region21
    $region20: #{tpu_custom_call.1} parent=1 // pred_region
      _
    $region21: #{tpu_custom_call.1} parent=1 // pred_fallthru
      _
    // Predicated region
    $region22: #{tpu_custom_call.1} parent=1 // pred_check
      _
    $region23: #{tpu_custom_call.1} parent=1 // pred_check_branch
      %57 = sbr.rel (0) target = $region25
    $region24: #{tpu_custom_call.1} parent=1 // pred_region
      %59 = dma.done [#allocation3], 256
    $region25: #{tpu_custom_call.1} parent=1 // pred_fallthru
      _
    // Predicated region
    $region26: #{tpu_custom_call.1} parent=1 // pred_check
      _
    $region27: #{tpu_custom_call.1} parent=1 // pred_check_branch
      %61 = sbr.rel (0) target = $region29
    $region28: #{tpu_custom_call.1} parent=1 // pred_region
      %63 = dma.done [#allocation6], 512
    $region29: #{tpu_custom_call.1} parent=1 // pred_fallthru
      _
    // Predicated region
    $region30: #{tpu_custom_call.1} parent=1 // pred_check
      _
    $region31: #{tpu_custom_call.1} parent=1 // pred_check_branch
      %65 = sbr.rel (0) target = $region33
    $region32: #{tpu_custom_call.1} parent=1 // pred_region
      %67 = dma.done [#allocation6], 2048
    $region33: #{tpu_custom_call.1} parent=1 // pred_fallthru
      _
    %v68 = vld [vmem:[#allocation2] sm:$0xff]
    %v69 = vld [vmem:[#allocation2 + $0x8] sm:$0xff]
    %v70 = vld [vmem:[#allocation5] sm:$0xff]
    %v71 = vld [vmem:[#allocation5 + $0x8] sm:$0xff]
    %v72 = vld [vmem:[#allocation5 + $0x10] sm:$0xff]
    %v73 = vld [vmem:[#allocation5 + $0x18] sm:$0xff]
    %v74 = vld [vmem:[%s2] sm:$0x1]
    %v76 = vperm.slane %v74, 0
    %vm78 = vcmask 261120
    %v80 = vsel %vm78, %v68, 0
    %v83 = vsel %vm78, %v69, 0
    %85 = vmatpush.msra.mxu0 0.0
    %86 = vmatpush.msra.mxu0 0.0
    %87 = vmatpush.msra.mxu0 0.0
    %88 = vmatpush.msra.mxu0 0.0
    %89 = vmatpush.msra.mxu0 0.0
    %90 = vmatpush.msra.mxu0 0.0
    %91 = vmatpush.msra.mxu0 0.0
    %92 = vmatpush.msra.mxu0 0.0
    %93 = vmatpush.msra.mxu0 0.0
    %94 = vmatpush.msra.mxu0 0.0
    %95 = vmatpush.msra.mxu0 0.0
    %96 = vmatpush.msra.mxu0 0.0
    %97 = vmatpush.msra.mxu0 %v73
    %98 = vmatpush.msra.mxu0 %v72
    %99 = vmatpush.msra.mxu0 %v71
    %100 = vmatpush.msra.mxu0 %v70
    %101 = vmatmul.f32.gmra.mxu0 %v80
    %v102 = vpop.f32.mrf.mxu0
    %v103 = vadd.f32 %v76, %v102
    %104 = vmatmul.f32.gmra.mxu0 %v83
    %v105 = vpop.f32.mrf.mxu0
    %v106 = vadd.f32 %v76, %v105
    %107 = vdwg.mxu0
    %v108 = vmax.f32 %v103, 0.0
    %v109 = vmax.f32 %v106, 0.0
    %v110 = vld [vmem:[#allocation7] sm:$0xff]
    %v111 = vld [vmem:[#allocation7 + $0x8] sm:$0xff]
    %v112 = vld [vmem:[#allocation7 + $0x10] sm:$0xff]
    %v113 = vld [vmem:[#allocation7 + $0x18] sm:$0xff]
    %v114 = vld [vmem:[#allocation7 + $0x20] sm:$0xff]
    %v115 = vld [vmem:[#allocation7 + $0x28] sm:$0xff]
    %v116 = vld [vmem:[#allocation7 + $0x30] sm:$0xff]
    %v117 = vld [vmem:[#allocation7 + $0x38] sm:$0xff]
    %v118 = vld [vmem:[#allocation7 + $0x40] sm:$0xff]
    %v119 = vld [vmem:[#allocation7 + $0x48] sm:$0xff]
    %v120 = vld [vmem:[#allocation7 + $0x50] sm:$0xff]
    %v121 = vld [vmem:[#allocation7 + $0x58] sm:$0xff]
    %v122 = vld [vmem:[#allocation7 + $0x60] sm:$0xff]
    %v123 = vld [vmem:[#allocation7 + $0x68] sm:$0xff]
    %v124 = vld [vmem:[#allocation7 + $0x70] sm:$0xff]
    %v125 = vld [vmem:[#allocation7 + $0x78] sm:$0xff]
    %v126 = vld [vmem:[%s4] sm:$0x1]
    %v128 = vperm.slane %v126, 0
    %130 = vmatpush.msra.mxu0 %v125
    %131 = vmatpush.msra.mxu0 %v124
    %132 = vmatpush.msra.mxu0 %v123
    %133 = vmatpush.msra.mxu0 %v122
    %134 = vmatpush.msra.mxu0 %v121
    %135 = vmatpush.msra.mxu0 %v120
    %136 = vmatpush.msra.mxu0 %v119
    %137 = vmatpush.msra.mxu0 %v118
    %138 = vmatpush.msra.mxu0 %v117
    %139 = vmatpush.msra.mxu0 %v116
    %140 = vmatpush.msra.mxu0 %v115
    %141 = vmatpush.msra.mxu0 %v114
    %142 = vmatpush.msra.mxu0 %v113
    %143 = vmatpush.msra.mxu0 %v112
    %144 = vmatpush.msra.mxu0 %v111
    %145 = vmatpush.msra.mxu0 %v110
    %146 = vmatmul.f32.gmra.mxu0 %v108
    %v147 = vpop.f32.mrf.mxu0
    %v148 = vadd.f32 %v128, %v147
    %149 = vmatmul.f32.gmra.mxu0 %v109
    %v150 = vpop.f32.mrf.mxu0
    %v151 = vadd.f32 %v128, %v150
    %152 = vdwg.mxu0
    %153 = vst [vmem:[#allocation8] sm:$0xff] %v148
    %154 = vst [vmem:[#allocation8 + $0x8] sm:$0xff] %v151
    // Predicated region
    $region34: #{tpu_custom_call.1} parent=1 // pred_check
      _
    $region35: #{tpu_custom_call.1} parent=1 // pred_check_branch
      %156 = sbr.rel (0) target = $region37
    $region36: #{tpu_custom_call.1} parent=1 // pred_region
      %158 = vsyncadd [#allocation4], 0
      %s159 = sshll.u32 [#allocation8], 4
      %s160 = int_to_ptr.vmem [resolvable:$true] %s159
      %s161 = sshll.u32 %s5, 4
      %s162 = int_to_ptr.hbm [resolvable:$true] %s161
      %167 = dma.vmem_to_hbm [thread:$0]  %s160, 256, %s162, [#allocation4], 128, 128, 8
    $region37: #{tpu_custom_call.1} parent=1 // pred_fallthru
      _
    // Predicated region
    $region38: #{tpu_custom_call.1} parent=1 // pred_check
      _
    $region39: #{tpu_custom_call.1} parent=1 // pred_check_branch
      %169 = sbr.rel (0) target = $region41
    $region40: #{tpu_custom_call.1} parent=1 // pred_region
      %171 = dma.done [#allocation4], 256
    $region41: #{tpu_custom_call.1} parent=1 // pred_fallthru
      _
    %172 = vsyncpa [#allocation3], 1
    %173 = vsyncpa [#allocation6], 1
    %174 = vsyncpa [#allocation4], 1

</llo_original>
